<compile_context>
chip_gen: v6e
topology: v6e:2x2x1
jax: 0.10.0
libtpu: 0.0.40
codegen_flags: <defaults>
</compile_context>

<pallas_src>
import functools

import jax
import jax.numpy as jnp
import numpy as np
from jax.experimental import pallas as pl
from jax.experimental.pallas import tpu as pltpu


# ----------------------------------------------------------------------------
# Pallas kernel (single invocation, no grid, no scratch)
# ----------------------------------------------------------------------------
def _rgcn_fused_kernel(xs_ref, wpack_ref, adj_ref, bias_ref, xout_ref, rout_ref,
                       *, num_nodes: int, num_bases: int, d_gcn: int, d_rel: int,
                       apply_tanh: bool):
    """Fused R-GCN layer + relation transform.

    xs_ref    : VMEM [N + Nr, Din]  bf16   rows 0..N-1 = node feats, rows N.. = init_rel
    wpack_ref : VMEM [Din, B*D + D + Drel] bf16   [basis_0 | .. | basis_{B-1} | w_root | w_rel]
    adj_ref   : VMEM [B, N, N]      bf16   comp-folded adjacency adj_b[b, dst, src]
    bias_ref  : VMEM [1, D]         f32
    xout_ref  : VMEM [N, D]         f32
    rout_ref  : VMEM [Nr, Drel]     f32
    """
    n = num_nodes
    root_off = num_bases * d_gcn
    rel_off = root_off + d_gcn

    # ONE lane-dense MXU contraction for every first-level linear map:
    #   y[:, b*D:(b+1)*D]       = Xs @ basis_b
    #   y[:, root_off:rel_off]  = Xs @ w_root
    #   y[:, rel_off:]          = Xs @ w_rel
    # bf16 operands, f32 accumulation.
    y = jnp.dot(xs_ref[...], wpack_ref[...], preferred_element_type=jnp.float32)

    # Relation transform: bottom Nr rows of Xs are init_rel  ->  r_out = init_rel @ w_rel.
    rout_ref[...] = y[n:, rel_off:rel_off + d_rel].astype(rout_ref.dtype)

    # Basis-space aggregation:  acc = sum_b adj_b @ (X @ basis_b) + X @ w_root + bias.
    acc = y[:n, root_off:root_off + d_gcn] + bias_ref[...]
    for b in range(num_bases):
        xb = y[:n, b * d_gcn:(b + 1) * d_gcn].astype(jnp.bfloat16)
        acc = acc + jnp.dot(adj_ref[b], xb, preferred_element_type=jnp.float32)
    if apply_tanh:
        acc = jnp.tanh(acc)                  # f32 epilogue (v5e has no bf16 VPU/EUP)
    xout_ref[...] = acc.astype(xout_ref.dtype)


def rgcn_forward_pallas(xs, w_pack, adj_b, bias, *, num_nodes: int, num_bases: int,
                        d_gcn: int, d_rel: int, apply_tanh: bool):
    """xs: [N+Nr, Din] bf16, w_pack: [Din, B*D + D + Drel] bf16, adj_b: [B, N, N] bf16,
    bias: [1, D] f32  ->  (x_out [N, D] f32, r_out [Nr, Drel] f32)."""
    n_rel_emb = xs.shape[0] - num_nodes

    kernel = functools.partial(_rgcn_fused_kernel, num_nodes=num_nodes,
                               num_bases=num_bases, d_gcn=d_gcn, d_rel=d_rel,
                               apply_tanh=apply_tanh)

    flops = (2 * xs.shape[0] * xs.shape[1] * w_pack.shape[1]
             + 2 * num_bases * num_nodes * num_nodes * d_gcn)
    bytes_accessed = ((xs.size + w_pack.size + adj_b.size) * 2   # bf16 inputs
                      + bias.size * 4
                      + (num_nodes * d_gcn + n_rel_emb * d_rel) * 4)
    cost = pl.CostEstimate(flops=flops,
                           transcendentals=num_nodes * d_gcn if apply_tanh else 0,
                           bytes_accessed=bytes_accessed)

    vmem_spec = pl.BlockSpec(memory_space=pltpu.MemorySpace.VMEM)
    x_out, r_out = pl.pallas_call(
        kernel,
        out_shape=(jax.ShapeDtypeStruct((num_nodes, d_gcn), jnp.float32),
                   jax.ShapeDtypeStruct((n_rel_emb, d_rel), jnp.float32)),
        in_specs=[vmem_spec, vmem_spec, vmem_spec, vmem_spec],
        out_specs=(vmem_spec, vmem_spec),
        compiler_params=pltpu.CompilerParams(vmem_limit_bytes=32 * 1024 * 1024),
        cost_estimate=cost,
    )(xs, w_pack, adj_b, bias)
    return x_out, r_out


# ----------------------------------------------------------------------------
# Model (parameter setup + hoisted constant work in plain JAX)
# ----------------------------------------------------------------------------
class Params:
    def __init__(self):
        self.num_ent = 64
        self.num_rel = 4            # 2*num_rel = 8 edge types (with inverses)
        self.init_dim = 32
        self.gcn_dim = 32
        self.embed_dim = 32
        self.gcn_layer = 1          # => gcn_dim = embed_dim, act = None
        self.rgcn_num_bases = 2
        self.rgcn_num_blocks = None
        self.hid_drop = 0.1
        self.use_type_feat = False


def xavier(key, shape):
    fan_in = shape[-2] if len(shape) > 1 else shape[0]
    fan_out = shape[-1]
    std = (2.0 / (fan_in + fan_out)) ** 0.5
    return std * jax.random.normal(key, shape, dtype=jnp.float32)


class RGCNModelPallas:
    def __init__(self, edge_index, edge_type, p: Params):
        self.p = p
        self.edge_index = edge_index       # [2, E]  row0 = src(j), row1 = dst(i)
        self.edge_type = edge_type         # [E]     values in [0, 2*num_rel)
        self.num_rel_types = 2 * p.num_rel
        p.gcn_dim = p.embed_dim if p.gcn_layer == 1 else p.gcn_dim

        key = jax.random.PRNGKey(0)
        ks = jax.random.split(key, 6)
        # module parameters (deterministic synthetic init, mirrors get_param shapes)
        self.init_embed = xavier(ks[0], (p.num_ent, p.init_dim))
        self.init_rel = xavier(ks[1], (self.num_rel_types, p.init_dim))
        self.w_rel = xavier(ks[2], (p.init_dim, p.embed_dim))
        # RGCNConv parameters (basis decomposition)
        B = p.rgcn_num_bases
        self.basis = xavier(ks[3], (B, p.init_dim, p.gcn_dim))
        self.comp = xavier(ks[4], (self.num_rel_types, B))
        self.w_root = xavier(ks[5], (p.init_dim, p.gcn_dim))
        self.bias = jnp.zeros((1, p.gcn_dim), jnp.float32)
        self.apply_tanh = p.gcn_layer != 1

        # ---- per-call constant work hoisted out of forward() ----------------
        # 1) comp folded into the adjacency (basis-space restructure, exact algebra).
        self.adj_bf = self._fold_adjacency(None).astype(jnp.bfloat16)
        # 2) packed lane-dense right operand [basis_0 | .. | basis_{B-1} | w_root | w_rel].
        self.w_pack_bf = jnp.concatenate(
            [self.basis[b] for b in range(B)] + [self.w_root, self.w_rel],
            axis=1).astype(jnp.bfloat16)
        # 3) stacked left operand [init_embed ; init_rel].
        self.xs_bf = jnp.concatenate([self.init_embed, self.init_rel],
                                     axis=0).astype(jnp.bfloat16)
        # 4) jitted fused forward (single pallas_call, no grid).
        self._fwd = jax.jit(functools.partial(
            rgcn_forward_pallas, num_nodes=p.num_ent, num_bases=B,
            d_gcn=p.gcn_dim, d_rel=p.embed_dim, apply_tanh=self.apply_tanh))

    # comp-folded adjacency [B, N, N]:  adj_b[b, dst, src] = sum_r comp[r, b] * adj_r
    def _fold_adjacency(self, edge_norm=None):
        N, B = self.p.num_ent, self.p.rgcn_num_bases
        src = self.edge_index[0]
        dst = self.edge_index[1]
        vals = jnp.ones_like(src, dtype=jnp.float32) if edge_norm is None else edge_norm
        w = self.comp[self.edge_type] * vals[:, None]          # [E, B]
        adj = jnp.zeros((B, N, N), jnp.float32)
        return adj.at[:, dst, src].add(w.T)

    # dense per-relation adjacency [R, N, N]  (reference path only)
    def _dense_adjacency(self, edge_norm=None):
        N, R = self.p.num_ent, self.num_rel_types
        src = self.edge_index[0]
        dst = self.edge_index[1]
        vals = jnp.ones_like(src, dtype=jnp.float32) if edge_norm is None else edge_norm
        adj = jnp.zeros((R, N, N), jnp.float32)
        return adj.at[self.edge_type, dst, src].add(vals)

    def forward(self, feature=None, edge_norm=None):
        # TODO(synk): external `feature` embeddings not wired into the packed fast path.
        adj = (self.adj_bf if edge_norm is None
               else self._fold_adjacency(edge_norm).astype(jnp.bfloat16))
        x, r = self._fwd(self.xs_bf, self.w_pack_bf, adj, self.bias)
        # dropout == identity in eval mode
        return x, r

    # pure-JAX f32 reference for correctness check
    def forward_ref(self, edge_norm=None):
        adj = self._dense_adjacency(edge_norm)
        w_stack = jnp.einsum("rb,bio->rio", self.comp, self.basis)
        x = (jnp.einsum("rnm,md,rdo->no", adj, self.init_embed, w_stack)
             + self.init_embed @ self.w_root + self.bias)
        if self.apply_tanh:
            x = jnp.tanh(x)
        r = self.init_rel @ self.w_rel
        return x, r


if __name__ == "__main__":
    p = Params()
    key = jax.random.PRNGKey(0)
    k1, k2, k3 = jax.random.split(key, 3)
    E = 128
    src = jax.random.randint(k1, (E,), 0, p.num_ent)
    dst = jax.random.randint(k2, (E,), 0, p.num_ent)
    edge_index = jnp.stack([src, dst], axis=0).astype(jnp.int32)
    edge_type = jax.random.randint(k3, (E,), 0, 2 * p.num_rel).astype(jnp.int32)

    model = RGCNModelPallas(edge_index, edge_type, p)
    x_out, r_out = model.forward()
    x_out = jax.block_until_ready(x_out)
    r_out = jax.block_until_ready(r_out)

    x_ref, r_ref = model.forward_ref()
    # bf16 MXU operands (f32 accumulation) -> slightly looser parity than pure f32.
    np.testing.assert_allclose(np.asarray(x_out), np.asarray(x_ref), rtol=2e-2, atol=2e-2)
    np.testing.assert_allclose(np.asarray(r_out), np.asarray(r_ref), rtol=2e-2, atol=2e-2)

    print("KERNEL_OK")
</pallas_src>

<mosaic_0001>
module attributes {stable_mosaic.version = 11 : i64} {
  func.func @_rgcn_fused_kernel(%arg0: memref<72x32xbf16, #tpu.memory_space<vmem>>, %arg1: memref<32x128xbf16, #tpu.memory_space<vmem>>, %arg2: memref<2x64x64xbf16, #tpu.memory_space<vmem>>, %arg3: memref<1x32xf32, #tpu.memory_space<vmem>>, %arg4: memref<64x32xf32, #tpu.memory_space<vmem>>, %arg5: memref<8x32xf32, #tpu.memory_space<vmem>>) attributes {dimension_semantics = [], scalar_prefetch = 0 : i64, scratch_operands = 0 : i64, tpu.core_type = #tpu.core_type<tc>} {
    %c0 = arith.constant 0 : index
    %c0_0 = arith.constant 0 : index
    %0 = vector.load %arg0[%c0, %c0_0] : memref<72x32xbf16, #tpu.memory_space<vmem>>, vector<72x32xbf16>
    %c0_1 = arith.constant 0 : index
    %c0_2 = arith.constant 0 : index
    %1 = vector.load %arg1[%c0_1, %c0_2] : memref<32x128xbf16, #tpu.memory_space<vmem>>, vector<32x128xbf16>
    %cst = arith.constant dense<0.000000e+00> : vector<72x128xf32>
    %2 = tpu.matmul %0, %1, %cst {dimension_numbers = #tpu.dot_dimension_numbers<[1], [0], [0], [1], [0, 0, 1, 1], [], []>} : vector<72x32xbf16>, vector<32x128xbf16>, vector<72x128xf32> -> vector<72x128xf32>
    %3 = vector.extract_strided_slice %2 {offsets = [64, 96], sizes = [8, 32], strides = [1, 1]} : vector<72x128xf32> to vector<8x32xf32>
    %c0_3 = arith.constant 0 : index
    %c0_4 = arith.constant 0 : index
    %4 = vector.load %arg5[%c0_3, %c0_4] : memref<8x32xf32, #tpu.memory_space<vmem>>, vector<8x32xf32>
    tpu.vector_store %arg5[%c0_3, %c0_4], %3 {strides = array<i32>} : memref<8x32xf32, #tpu.memory_space<vmem>>, vector<8x32xf32>,
    %5 = vector.extract_strided_slice %2 {offsets = [0, 64], sizes = [64, 32], strides = [1, 1]} : vector<72x128xf32> to vector<64x32xf32>
    %c0_5 = arith.constant 0 : index
    %c0_6 = arith.constant 0 : index
    %6 = vector.load %arg3[%c0_5, %c0_6] : memref<1x32xf32, #tpu.memory_space<vmem>>, vector<1x32xf32>
    %7 = vector.broadcast %6 : vector<1x32xf32> to vector<64x32xf32>
    %8 = arith.addf %5, %7 : vector<64x32xf32>
    %9 = vector.extract_strided_slice %2 {offsets = [0, 0], sizes = [64, 32], strides = [1, 1]} : vector<72x128xf32> to vector<64x32xf32>
    %10 = arith.truncf %9 : vector<64x32xf32> to vector<64x32xbf16>
    %c0_7 = arith.constant 0 : index
    %c0_8 = arith.constant 0 : index
    %c0_9 = arith.constant 0 : index
    %11 = vector.load %arg2[%c0_7, %c0_8, %c0_9] : memref<2x64x64xbf16, #tpu.memory_space<vmem>>, vector<1x64x64xbf16>
    %12 = vector.shape_cast %11 : vector<1x64x64xbf16> to vector<64x64xbf16>
    %cst_10 = arith.constant dense<0.000000e+00> : vector<64x32xf32>
    %13 = tpu.matmul %12, %10, %cst_10 {dimension_numbers = #tpu.dot_dimension_numbers<[1], [0], [0], [1], [0, 0, 1, 1], [], []>} : vector<64x64xbf16>, vector<64x32xbf16>, vector<64x32xf32> -> vector<64x32xf32>
    %14 = arith.addf %8, %13 : vector<64x32xf32>
    %15 = vector.extract_strided_slice %2 {offsets = [0, 32], sizes = [64, 32], strides = [1, 1]} : vector<72x128xf32> to vector<64x32xf32>
    %16 = arith.truncf %15 : vector<64x32xf32> to vector<64x32xbf16>
    %c1 = arith.constant 1 : index
    %c0_11 = arith.constant 0 : index
    %c0_12 = arith.constant 0 : index
    %17 = vector.load %arg2[%c1, %c0_11, %c0_12] : memref<2x64x64xbf16, #tpu.memory_space<vmem>>, vector<1x64x64xbf16>
    %18 = vector.shape_cast %17 : vector<1x64x64xbf16> to vector<64x64xbf16>
    %cst_13 = arith.constant dense<0.000000e+00> : vector<64x32xf32>
    %19 = tpu.matmul %18, %16, %cst_13 {dimension_numbers = #tpu.dot_dimension_numbers<[1], [0], [0], [1], [0, 0, 1, 1], [], []>} : vector<64x64xbf16>, vector<64x32xbf16>, vector<64x32xf32> -> vector<64x32xf32>
    %20 = arith.addf %14, %19 : vector<64x32xf32>
    %c0_14 = arith.constant 0 : index
    %c0_15 = arith.constant 0 : index
    %21 = vector.load %arg4[%c0_14, %c0_15] : memref<64x32xf32, #tpu.memory_space<vmem>>, vector<64x32xf32>
    tpu.vector_store %arg4[%c0_14, %c0_15], %20 {strides = array<i32>} : memref<64x32xf32, #tpu.memory_space<vmem>>, vector<64x32xf32>,
    return
  }
}

</mosaic_0001>

<llo_original>
// kernel: rgcn_forward_pallas.1
$region0: #{rgcn_forward_pallas.1}
  #allocation0 [shape = 'u32[]', space=smem, size = 0x4, offset = 0x4, fixed_abs, tag = 'smem constant byte address 0x4 - core index']
  #allocation1 [shape = 'u32[144,128]{1,0:T(1,128)}', space=vmem, size = 0x12000, scoped, tag = 'internal scratch']
  %s0 = inlined_call_operand.vmem [shape: bf16[72,32], index: 0, kind: input, shape index: {}]
  %s1 = inlined_call_operand.vmem [shape: bf16[32,128], index: 1, kind: input, shape index: {}]
  %s2 = inlined_call_operand.hbm [shape: bf16[2,64,64], index: 2, kind: input, shape index: {}]
  %s3 = inlined_call_operand.vmem [shape: f32[1,32], index: 3, kind: input, shape index: {}]
  %s4 = inlined_call_operand.vmem [shape: f32[64,32], index: 4, kind: output, shape index: {0}]
  %s5 = inlined_call_operand.hbm [shape: f32[8,32], index: 5, kind: output, shape index: {1}]
  %6 = xla_tuple %s4, %s5
  %s7 = sld [smem:[#allocation0]]
  $region38: #{rgcn_forward_pallas.1} parent=0
    _
  %s9 = ssub.s32 1, %s7
  %s10 = scalar_select 0, %s9, %s7
  $region1: #{rgcn_forward_pallas.1} parent=0
    #allocation2 [shape = 'u8[32768]{0}', space=vmem, size = 0x8000, scoped, tag = 'input window, operand 2, single buffered']
    #allocation3 [shape = 's32[1]{0}', space=sflag, size = 0x4, scoped, tag = 'scoped memory for rgcn_forward_pallas.1']
    #allocation4 [shape = 's32[1]{0}', space=sflag, size = 0x4, scoped, tag = 'scoped memory for rgcn_forward_pallas.1']
    #allocation5 [shape = 'u8[4096]{0}', space=vmem, size = 0x1000, scoped, tag = 'output window, operand 1, single buffered']
    %11 = vsyncpa [#allocation3], 0
    %12 = vsyncpa [#allocation4], 0
    // Predicated region
    $region2: #{rgcn_forward_pallas.1} parent=1 // pred_check
      _
    $region3: #{rgcn_forward_pallas.1} parent=1 // pred_check_branch
      %14 = sbr.rel (0) target = $region5
    $region4: #{rgcn_forward_pallas.1} parent=1 // pred_region
      _
    $region5: #{rgcn_forward_pallas.1} parent=1 // pred_fallthru
      _
    // Predicated region
    $region6: #{rgcn_forward_pallas.1} parent=1 // pred_check
      _
    $region7: #{rgcn_forward_pallas.1} parent=1 // pred_check_branch
      %16 = sbr.rel (0) target = $region9
    $region8: #{rgcn_forward_pallas.1} parent=1 // pred_region
      _
    $region9: #{rgcn_forward_pallas.1} parent=1 // pred_fallthru
      _
    // Predicated region
    $region10: #{rgcn_forward_pallas.1} parent=1 // pred_check
      _
    $region11: #{rgcn_forward_pallas.1} parent=1 // pred_check_branch
      %18 = sbr.rel (0) target = $region13
    $region12: #{rgcn_forward_pallas.1} parent=1 // pred_region
      %s20 = ssub.s32 1024, 1024
      %21 = vsyncadd [#allocation3], %s20
      %s22 = sshll.u32 [#allocation2], 4
      %s23 = int_to_ptr.vmem [resolvable:$true] %s22
      %28 = dma.hbm_to_vmem [thread:$0]  %s2, 1024, %s23, [#allocation3], 64, 64, 4
    $region13: #{rgcn_forward_pallas.1} parent=1 // pred_fallthru
      _
    // Predicated region
    $region14: #{rgcn_forward_pallas.1} parent=1 // pred_check
      _
    $region15: #{rgcn_forward_pallas.1} parent=1 // pred_check_branch
      %30 = sbr.rel (0) target = $region17
    $region16: #{rgcn_forward_pallas.1} parent=1 // pred_region
      _
    $region17: #{rgcn_forward_pallas.1} parent=1 // pred_fallthru
      _
    // Predicated region
    $region18: #{rgcn_forward_pallas.1} parent=1 // pred_check
      _
    $region19: #{rgcn_forward_pallas.1} parent=1 // pred_check_branch
      %32 = sbr.rel (0) target = $region21
    $region20: #{rgcn_forward_pallas.1} parent=1 // pred_region
      %33 = dma.done [#allocation3], 1024
    $region21: #{rgcn_forward_pallas.1} parent=1 // pred_fallthru
      _
    %v35 = vld [vmem:[%s0] sm:$0xf]
    %v36 = vld [vmem:[%s0 + $0x4] sm:$0xf]
    %v37 = vld [vmem:[%s0 + $0x8] sm:$0xf]
    %v38 = vld [vmem:[%s0 + $0xc] sm:$0xf]
    %v39 = vld [vmem:[%s0 + $0x10] sm:$0xf]
    %v40 = vld [vmem:[%s0 + $0x14] sm:$0xf]
    %v41 = vld [vmem:[%s0 + $0x18] sm:$0xf]
    %v42 = vld [vmem:[%s0 + $0x1c] sm:$0xf]
    %v43 = vld [vmem:[%s0 + $0x20] sm:$0xf]
    %v44 = vld [vmem:[%s1] sm:$0xf]
    %v45 = vld [vmem:[%s1 + $0x4] sm:$0xf]
    %v46 = vld [vmem:[%s1 + $0x8] sm:$0xf]
    %v47 = vld [vmem:[%s1 + $0xc] sm:$0xf]
    %v57 = vunpack.c.l.b16 %v35
    %v58 = vunpack.c.l.b16 %v36
    %v59 = vunpack.c.l.b16 %v37
    %v60 = vunpack.c.l.b16 %v38
    %v61 = vunpack.c.l.b16 %v39
    %v62 = vunpack.c.l.b16 %v40
    %v63 = vunpack.c.l.b16 %v41
    %v64 = vunpack.c.l.b16 %v42
    %v65 = vunpack.c.l.b16 %v43
    %v66 = vpack.c.b16 %v58, %v57
    %v67 = vpack.c.b16 %v60, %v59
    %v68 = vpack.c.b16 %v62, %v61
    %v69 = vpack.c.b16 %v64, %v63
    %v70 = vpack.c.b16 %v65, %v65
    %v75 = vunpack.c.l.b16 %v44
    %v76 = vunpack.c.l.b16 %v45
    %v77 = vunpack.c.l.b16 %v46
    %v78 = vunpack.c.l.b16 %v47
    %v79 = vpack.c.b16 %v76, %v75
    %v80 = vpack.c.b16 %v78, %v77
    %vm83 = vcmask 261120
    %v85 = vsel %vm83, %v66, 0
    %v88 = vsel %vm83, %v67, 0
    %v91 = vsel %vm83, %v68, 0
    %v94 = vsel %vm83, %v69, 0
    %v97 = vsel %vm83, %v70, 0
    %99 = vmatprep.subr.bf16.mxu0 0
    %100 = vmatpush1.bf16.msra.mxu0 0
    %101 = vmatprep.subr.bf16.mxu0 0
    %102 = vmatpush1.bf16.msra.mxu0 0
    %103 = vmatprep.subr.bf16.mxu0 0
    %104 = vmatpush1.bf16.msra.mxu0 0
    %105 = vmatprep.subr.bf16.mxu0 0
    %106 = vmatpush1.bf16.msra.mxu0 0
    %107 = vmatprep.subr.bf16.mxu0 0
    %108 = vmatpush1.bf16.msra.mxu0 0
    %109 = vmatprep.subr.bf16.mxu0 0
    %110 = vmatpush1.bf16.msra.mxu0 0
    %111 = vmatprep.subr.bf16.mxu0 0
    %112 = vmatpush1.bf16.msra.mxu0 %v80
    %113 = vmatprep.subr.bf16.mxu0 0
    %114 = vmatpush1.bf16.msra.mxu0 %v79
    %115 = vmatprep.subr.bf16.mxu0 0
    %116 = vmatpush2.bf16.msra.mxu0 0
    %117 = vmatprep.subr.bf16.mxu0 0
    %118 = vmatpush2.bf16.msra.mxu0 0
    %119 = vmatprep.subr.bf16.mxu0 0
    %120 = vmatpush2.bf16.msra.mxu0 0
    %121 = vmatprep.subr.bf16.mxu0 0
    %122 = vmatpush2.bf16.msra.mxu0 0
    %123 = vmatprep.subr.bf16.mxu0 0
    %124 = vmatpush2.bf16.msra.mxu0 0
    %125 = vmatprep.subr.bf16.mxu0 0
    %126 = vmatpush2.bf16.msra.mxu0 0
    %127 = vmatprep.subr.bf16.mxu0 0
    %128 = vmatpush2.bf16.msra.mxu0 0
    %129 = vmatprep.subr.bf16.mxu0 0
    %130 = vmatpush2.bf16.msra.mxu0 0
    %131 = vmatprep.mubr.bf16.mxu0 0
    %132 = vmatmul.mubr.bf16.gmra.mxu0 %v85
    %v133 = vpop.f32.mrf.mxu0
    %v134 = vadd.f32 0.0, %v133
    %v135 = vpop.f32.mrf.mxu0
    %v136 = vpop.f32.mrf.mxu0
    %v137 = vadd.f32 0.0, %v136
    %v138 = vpop.f32.mrf.mxu0
    %139 = vmatprep.mubr.bf16.mxu0 0
    %140 = vmatmul.mubr.bf16.gmra.mxu0 %v88
    %v141 = vpop.f32.mrf.mxu0
    %v142 = vadd.f32 0.0, %v141
    %v143 = vpop.f32.mrf.mxu0
    %v144 = vpop.f32.mrf.mxu0
    %v145 = vadd.f32 0.0, %v144
    %v146 = vpop.f32.mrf.mxu0
    %147 = vmatprep.mubr.bf16.mxu0 0
    %148 = vmatmul.mubr.bf16.gmra.mxu0 %v91
    %v149 = vpop.f32.mrf.mxu0
    %v150 = vadd.f32 0.0, %v149
    %v151 = vpop.f32.mrf.mxu0
    %v152 = vpop.f32.mrf.mxu0
    %v153 = vadd.f32 0.0, %v152
    %v154 = vpop.f32.mrf.mxu0
    %155 = vmatprep.mubr.bf16.mxu0 0
    %156 = vmatmul.mubr.bf16.gmra.mxu0 %v94
    %v157 = vpop.f32.mrf.mxu0
    %v158 = vadd.f32 0.0, %v157
    %v159 = vpop.f32.mrf.mxu0
    %v160 = vpop.f32.mrf.mxu0
    %v161 = vadd.f32 0.0, %v160
    %v162 = vpop.f32.mrf.mxu0
    %163 = vmatprep.mubr.bf16.mxu0 0
    %164 = vmatmul.mubr.bf16.gmra.mxu0 %v97
    %v165 = vpop.f32.mrf.mxu0
    %v166 = vadd.f32 0.0, %v165
    %v167 = vpop.f32.mrf.mxu0
    %v168 = vpop.f32.mrf.mxu0
    %v169 = vpop.f32.mrf.mxu0
    %170 = vdwg.mxu0
    %172 = vrot.lane.b32.xlu0 %v166, 32
    %v173 = vpop.permute.xlu0 %172
    %175 = vst.msk [vmem:[#allocation5] sm:$0xff] %vm83, %v173
    %v176 = vld [vmem:[%s3] sm:$0x1]
    %v178 = vlaneseq
    %v179 = vshrl.u32 %v178, 7
    %v180 = vsub.s32 0, %v179
    %v181 = vrot.slane %v176, %v180
    %182 = vrot.lane.b32.xlu0 %v181, 64
    %v183 = vpop.permute.xlu0 %182
    %v185 = vadd.f32 %v134, %v183
    %v186 = vadd.f32 %v137, %v183
    %v187 = vadd.f32 %v142, %v183
    %v188 = vadd.f32 %v145, %v183
    %v189 = vadd.f32 %v150, %v183
    %v190 = vadd.f32 %v153, %v183
    %v191 = vadd.f32 %v158, %v183
    %v192 = vadd.f32 %v161, %v183
    %v193 = vpack.c.bf16 %v137, %v134
    %v194 = vpack.c.bf16 %v145, %v142
    %v195 = vpack.c.bf16 %v153, %v150
    %v196 = vpack.c.bf16 %v161, %v158
    %v197 = vld [vmem:[#allocation2] sm:$0xf]
    %v198 = vld [vmem:[#allocation2 + $0x4] sm:$0xf]
    %v199 = vld [vmem:[#allocation2 + $0x8] sm:$0xf]
    %v200 = vld [vmem:[#allocation2 + $0xc] sm:$0xf]
    %v201 = vld [vmem:[#allocation2 + $0x10] sm:$0xf]
    %v202 = vld [vmem:[#allocation2 + $0x14] sm:$0xf]
    %v203 = vld [vmem:[#allocation2 + $0x18] sm:$0xf]
    %v204 = vld [vmem:[#allocation2 + $0x1c] sm:$0xf]
    %v213 = vunpack.c.l.b16 %v197
    %v214 = vunpack.c.l.b16 %v198
    %v215 = vunpack.c.l.b16 %v199
    %v216 = vunpack.c.l.b16 %v200
    %v217 = vunpack.c.l.b16 %v201
    %v218 = vunpack.c.l.b16 %v202
    %v219 = vunpack.c.l.b16 %v203
    %v220 = vunpack.c.l.b16 %v204
    %v221 = vpack.c.b16 %v214, %v213
    %v222 = vpack.c.b16 %v216, %v215
    %v223 = vpack.c.b16 %v218, %v217
    %v224 = vpack.c.b16 %v220, %v219
    %vm225 = vcmask 523264
    %v227 = vsel %vm225, %v221, 0
    %v230 = vsel %vm225, %v222, 0
    %v233 = vsel %vm225, %v223, 0
    %v236 = vsel %vm225, %v224, 0
    %238 = vmatprep.subr.bf16.mxu0 0
    %239 = vmatpush1.bf16.msra.mxu0 0
    %240 = vmatprep.subr.bf16.mxu0 0
    %241 = vmatpush1.bf16.msra.mxu0 0
    %242 = vmatprep.subr.bf16.mxu0 0
    %243 = vmatpush1.bf16.msra.mxu0 0
    %244 = vmatprep.subr.bf16.mxu0 0
    %245 = vmatpush1.bf16.msra.mxu0 0
    %246 = vmatprep.subr.bf16.mxu0 0
    %247 = vmatpush1.bf16.msra.mxu0 %v196
    %248 = vmatprep.subr.bf16.mxu0 0
    %249 = vmatpush1.bf16.msra.mxu0 %v195
    %250 = vmatprep.subr.bf16.mxu0 0
    %251 = vmatpush1.bf16.msra.mxu0 %v194
    %252 = vmatprep.subr.bf16.mxu0 0
    %253 = vmatpush1.bf16.msra.mxu0 %v193
    %254 = vmatprep.subr.bf16.mxu0 0
    %255 = vmatpush2.bf16.msra.mxu0 0
    %256 = vmatprep.subr.bf16.mxu0 0
    %257 = vmatpush2.bf16.msra.mxu0 0
    %258 = vmatprep.subr.bf16.mxu0 0
    %259 = vmatpush2.bf16.msra.mxu0 0
    %260 = vmatprep.subr.bf16.mxu0 0
    %261 = vmatpush2.bf16.msra.mxu0 0
    %262 = vmatprep.subr.bf16.mxu0 0
    %263 = vmatpush2.bf16.msra.mxu0 0
    %264 = vmatprep.subr.bf16.mxu0 0
    %265 = vmatpush2.bf16.msra.mxu0 0
    %266 = vmatprep.subr.bf16.mxu0 0
    %267 = vmatpush2.bf16.msra.mxu0 0
    %268 = vmatprep.subr.bf16.mxu0 0
    %269 = vmatpush2.bf16.msra.mxu0 0
    %270 = vmatprep.mubr.bf16.mxu0 0
    %271 = vmatmul.mubr.bf16.gmra.mxu0 %v227
    %v272 = vpop.f32.mrf.mxu0
    %v273 = vadd.f32 0.0, %v272
    %v274 = vpop.f32.mrf.mxu0
    %v275 = vpop.f32.mrf.mxu0
    %v276 = vadd.f32 0.0, %v275
    %v277 = vpop.f32.mrf.mxu0
    %278 = vmatprep.mubr.bf16.mxu0 0
    %279 = vmatmul.mubr.bf16.gmra.mxu0 %v230
    %v280 = vpop.f32.mrf.mxu0
    %v281 = vadd.f32 0.0, %v280
    %v282 = vpop.f32.mrf.mxu0
    %v283 = vpop.f32.mrf.mxu0
    %v284 = vadd.f32 0.0, %v283
    %v285 = vpop.f32.mrf.mxu0
    %286 = vmatprep.mubr.bf16.mxu0 0
    %287 = vmatmul.mubr.bf16.gmra.mxu0 %v233
    %v288 = vpop.f32.mrf.mxu0
    %v289 = vadd.f32 0.0, %v288
    %v290 = vpop.f32.mrf.mxu0
    %v291 = vpop.f32.mrf.mxu0
    %v292 = vadd.f32 0.0, %v291
    %v293 = vpop.f32.mrf.mxu0
    %294 = vmatprep.mubr.bf16.mxu0 0
    %295 = vmatmul.mubr.bf16.gmra.mxu0 %v236
    %v296 = vpop.f32.mrf.mxu0
    %v297 = vadd.f32 0.0, %v296
    %v298 = vpop.f32.mrf.mxu0
    %v299 = vpop.f32.mrf.mxu0
    %v300 = vadd.f32 0.0, %v299
    %v301 = vpop.f32.mrf.mxu0
    %302 = vdwg.mxu0
    %311 = vrot.lane.b32.xlu0 %v273, 64
    %v312 = vpop.permute.xlu0 %311
    %313 = vrot.lane.b32.xlu0 %v276, 64
    %v314 = vpop.permute.xlu0 %313
    %315 = vrot.lane.b32.xlu0 %v281, 64
    %v316 = vpop.permute.xlu0 %315
    %317 = vrot.lane.b32.xlu0 %v284, 64
    %v318 = vpop.permute.xlu0 %317
    %319 = vrot.lane.b32.xlu0 %v289, 64
    %v320 = vpop.permute.xlu0 %319
    %321 = vrot.lane.b32.xlu0 %v292, 64
    %v322 = vpop.permute.xlu0 %321
    %323 = vrot.lane.b32.xlu0 %v297, 64
    %v324 = vpop.permute.xlu0 %323
    %325 = vrot.lane.b32.xlu0 %v300, 64
    %v326 = vpop.permute.xlu0 %325
    %v335 = vadd.f32 %v185, %v312
    %v336 = vadd.f32 %v186, %v314
    %v337 = vadd.f32 %v187, %v316
    %v338 = vadd.f32 %v188, %v318
    %v339 = vadd.f32 %v189, %v320
    %v340 = vadd.f32 %v190, %v322
    %v341 = vadd.f32 %v191, %v324
    %v342 = vadd.f32 %v192, %v326
    %s343 = scalar_lea.vmem [#allocation2], 32
    %v344 = vld [vmem:[%s343] sm:$0xf]
    %v345 = vld [vmem:[%s343 + $0x4] sm:$0xf]
    %v346 = vld [vmem:[%s343 + $0x8] sm:$0xf]
    %v347 = vld [vmem:[%s343 + $0xc] sm:$0xf]
    %v348 = vld [vmem:[%s343 + $0x10] sm:$0xf]
    %v349 = vld [vmem:[%s343 + $0x14] sm:$0xf]
    %v350 = vld [vmem:[%s343 + $0x18] sm:$0xf]
    %v351 = vld [vmem:[%s343 + $0x1c] sm:$0xf]
    %v360 = vunpack.c.l.b16 %v344
    %v361 = vunpack.c.l.b16 %v345
    %v362 = vunpack.c.l.b16 %v346
    %v363 = vunpack.c.l.b16 %v347
    %v364 = vunpack.c.l.b16 %v348
    %v365 = vunpack.c.l.b16 %v349
    %v366 = vunpack.c.l.b16 %v350
    %v367 = vunpack.c.l.b16 %v351
    %v368 = vpack.c.b16 %v361, %v360
    %v369 = vpack.c.b16 %v363, %v362
    %v370 = vpack.c.b16 %v365, %v364
    %v371 = vpack.c.b16 %v367, %v366
    %376 = vrot.lane.b32.xlu0 %v193, 96
    %v377 = vpop.permute.xlu0 %376
    %378 = vrot.lane.b32.xlu0 %v194, 96
    %v379 = vpop.permute.xlu0 %378
    %380 = vrot.lane.b32.xlu0 %v195, 96
    %v381 = vpop.permute.xlu0 %380
    %382 = vrot.lane.b32.xlu0 %v196, 96
    %v383 = vpop.permute.xlu0 %382
    %v389 = vsel %vm225, %v368, 0
    %v392 = vsel %vm225, %v369, 0
    %v395 = vsel %vm225, %v370, 0
    %v398 = vsel %vm225, %v371, 0
    %400 = vmatprep.subr.bf16.mxu0 0
    %401 = vmatpush1.bf16.msra.mxu0 0
    %402 = vmatprep.subr.bf16.mxu0 0
    %403 = vmatpush1.bf16.msra.mxu0 0
    %404 = vmatprep.subr.bf16.mxu0 0
    %405 = vmatpush1.bf16.msra.mxu0 0
    %406 = vmatprep.subr.bf16.mxu0 0
    %407 = vmatpush1.bf16.msra.mxu0 0
    %408 = vmatprep.subr.bf16.mxu0 0
    %409 = vmatpush1.bf16.msra.mxu0 %v383
    %410 = vmatprep.subr.bf16.mxu0 0
    %411 = vmatpush1.bf16.msra.mxu0 %v381
    %412 = vmatprep.subr.bf16.mxu0 0
    %413 = vmatpush1.bf16.msra.mxu0 %v379
    %414 = vmatprep.subr.bf16.mxu0 0
    %415 = vmatpush1.bf16.msra.mxu0 %v377
    %416 = vmatprep.subr.bf16.mxu0 0
    %417 = vmatpush2.bf16.msra.mxu0 0
    %418 = vmatprep.subr.bf16.mxu0 0
    %419 = vmatpush2.bf16.msra.mxu0 0
    %420 = vmatprep.subr.bf16.mxu0 0
    %421 = vmatpush2.bf16.msra.mxu0 0
    %422 = vmatprep.subr.bf16.mxu0 0
    %423 = vmatpush2.bf16.msra.mxu0 0
    %424 = vmatprep.subr.bf16.mxu0 0
    %425 = vmatpush2.bf16.msra.mxu0 0
    %426 = vmatprep.subr.bf16.mxu0 0
    %427 = vmatpush2.bf16.msra.mxu0 0
    %428 = vmatprep.subr.bf16.mxu0 0
    %429 = vmatpush2.bf16.msra.mxu0 0
    %430 = vmatprep.subr.bf16.mxu0 0
    %431 = vmatpush2.bf16.msra.mxu0 0
    %432 = vmatprep.mubr.bf16.mxu0 0
    %433 = vmatmul.mubr.bf16.gmra.mxu0 %v389
    %v434 = vpop.f32.mrf.mxu0
    %v435 = vadd.f32 0.0, %v434
    %v436 = vpop.f32.mrf.mxu0
    %v437 = vpop.f32.mrf.mxu0
    %v438 = vadd.f32 0.0, %v437
    %v439 = vpop.f32.mrf.mxu0
    %440 = vmatprep.mubr.bf16.mxu0 0
    %441 = vmatmul.mubr.bf16.gmra.mxu0 %v392
    %v442 = vpop.f32.mrf.mxu0
    %v443 = vadd.f32 0.0, %v442
    %v444 = vpop.f32.mrf.mxu0
    %v445 = vpop.f32.mrf.mxu0
    %v446 = vadd.f32 0.0, %v445
    %v447 = vpop.f32.mrf.mxu0
    %448 = vmatprep.mubr.bf16.mxu0 0
    %449 = vmatmul.mubr.bf16.gmra.mxu0 %v395
    %v450 = vpop.f32.mrf.mxu0
    %v451 = vadd.f32 0.0, %v450
    %v452 = vpop.f32.mrf.mxu0
    %v453 = vpop.f32.mrf.mxu0
    %v454 = vadd.f32 0.0, %v453
    %v455 = vpop.f32.mrf.mxu0
    %456 = vmatprep.mubr.bf16.mxu0 0
    %457 = vmatmul.mubr.bf16.gmra.mxu0 %v398
    %v458 = vpop.f32.mrf.mxu0
    %v459 = vadd.f32 0.0, %v458
    %v460 = vpop.f32.mrf.mxu0
    %v461 = vpop.f32.mrf.mxu0
    %v462 = vadd.f32 0.0, %v461
    %v463 = vpop.f32.mrf.mxu0
    %464 = vdwg.mxu0
    %473 = vrot.lane.b32.xlu0 %v435, 64
    %v474 = vpop.permute.xlu0 %473
    %475 = vrot.lane.b32.xlu0 %v438, 64
    %v476 = vpop.permute.xlu0 %475
    %477 = vrot.lane.b32.xlu0 %v443, 64
    %v478 = vpop.permute.xlu0 %477
    %479 = vrot.lane.b32.xlu0 %v446, 64
    %v480 = vpop.permute.xlu0 %479
    %481 = vrot.lane.b32.xlu0 %v451, 64
    %v482 = vpop.permute.xlu0 %481
    %483 = vrot.lane.b32.xlu0 %v454, 64
    %v484 = vpop.permute.xlu0 %483
    %485 = vrot.lane.b32.xlu0 %v459, 64
    %v486 = vpop.permute.xlu0 %485
    %487 = vrot.lane.b32.xlu0 %v462, 64
    %v488 = vpop.permute.xlu0 %487
    %v497 = vadd.f32 %v335, %v474
    %v498 = vadd.f32 %v336, %v476
    %v499 = vadd.f32 %v337, %v478
    %v500 = vadd.f32 %v338, %v480
    %v501 = vadd.f32 %v339, %v482
    %v502 = vadd.f32 %v340, %v484
    %v503 = vadd.f32 %v341, %v486
    %v504 = vadd.f32 %v342, %v488
    %513 = vrot.lane.b32.xlu0 %v497, 64
    %v514 = vpop.permute.xlu0 %513
    %515 = vrot.lane.b32.xlu0 %v498, 64
    %v516 = vpop.permute.xlu0 %515
    %517 = vrot.lane.b32.xlu0 %v499, 64
    %v518 = vpop.permute.xlu0 %517
    %519 = vrot.lane.b32.xlu0 %v500, 64
    %v520 = vpop.permute.xlu0 %519
    %521 = vrot.lane.b32.xlu0 %v501, 64
    %v522 = vpop.permute.xlu0 %521
    %523 = vrot.lane.b32.xlu0 %v502, 64
    %v524 = vpop.permute.xlu0 %523
    %525 = vrot.lane.b32.xlu0 %v503, 64
    %v526 = vpop.permute.xlu0 %525
    %527 = vrot.lane.b32.xlu0 %v504, 64
    %v528 = vpop.permute.xlu0 %527
    %537 = vst.msk [vmem:[%s4] sm:$0xff] %vm83, %v514
    %538 = vst.msk [vmem:[%s4 + $0x8] sm:$0xff] %vm83, %v516
    %539 = vst.msk [vmem:[%s4 + $0x10] sm:$0xff] %vm83, %v518
    %540 = vst.msk [vmem:[%s4 + $0x18] sm:$0xff] %vm83, %v520
    %541 = vst.msk [vmem:[%s4 + $0x20] sm:$0xff] %vm83, %v522
    %542 = vst.msk [vmem:[%s4 + $0x28] sm:$0xff] %vm83, %v524
    %543 = vst.msk [vmem:[%s4 + $0x30] sm:$0xff] %vm83, %v526
    %544 = vst.msk [vmem:[%s4 + $0x38] sm:$0xff] %vm83, %v528
    // Predicated region
    $region22: #{rgcn_forward_pallas.1} parent=1 // pred_check
      _
    $region23: #{rgcn_forward_pallas.1} parent=1 // pred_check_branch
      %546 = sbr.rel (0) target = $region25
    $region24: #{rgcn_forward_pallas.1} parent=1 // pred_region
      _
    $region25: #{rgcn_forward_pallas.1} parent=1 // pred_fallthru
      _
    // Predicated region
    $region26: #{rgcn_forward_pallas.1} parent=1 // pred_check
      _
    $region27: #{rgcn_forward_pallas.1} parent=1 // pred_check_branch
      %548 = sbr.rel (0) target = $region29
    $region28: #{rgcn_forward_pallas.1} parent=1 // pred_region
      %s550 = ssub.s32 128, 128
      %551 = vsyncadd [#allocation4], %s550
      %s553 = sshll.u32 [#allocation5], 4
      %s554 = int_to_ptr.vmem [resolvable:$true] %s553
      %556 = dma.vmem_to_hbm [thread:$0]  %s554, 128, %s5, [#allocation4]
    $region29: #{rgcn_forward_pallas.1} parent=1 // pred_fallthru
      _
    // Predicated region
    $region30: #{rgcn_forward_pallas.1} parent=1 // pred_check
      _
    $region31: #{rgcn_forward_pallas.1} parent=1 // pred_check_branch
      %558 = sbr.rel (0) target = $region33
    $region32: #{rgcn_forward_pallas.1} parent=1 // pred_region
      _
    $region33: #{rgcn_forward_pallas.1} parent=1 // pred_fallthru
      _
    // Predicated region
    $region34: #{rgcn_forward_pallas.1} parent=1 // pred_check
      _
    $region35: #{rgcn_forward_pallas.1} parent=1 // pred_check_branch
      %560 = sbr.rel (0) target = $region37
    $region36: #{rgcn_forward_pallas.1} parent=1 // pred_region
      %561 = dma.done [#allocation4], 128
    $region37: #{rgcn_forward_pallas.1} parent=1 // pred_fallthru
      _
    %562 = vsyncpa [#allocation3], 1
    %563 = vsyncpa [#allocation4], 1

</llo_original>
